<compile_context>
chip_gen: v5e
topology: v5e:2x2
jax: 0.10.0
libtpu: 0.0.40
codegen_flags: <defaults>
</compile_context>

<pallas_src>
import math
from functools import partial

import numpy as np
import jax
import jax.numpy as jnp
from jax import lax
from jax.experimental import pallas as pl
from jax.experimental.pallas import tpu as pltpu

F32 = jnp.float32
BF16 = jnp.bfloat16
_EPS = 1e-6
_NEG_INF = -1e30


def _layer_norm(v, w, b):
    mu = jnp.mean(v, axis=-1, keepdims=True)
    c = v - mu
    var = jnp.mean(c * c, axis=-1, keepdims=True)
    return c * lax.rsqrt(var + _EPS) * w + b


# --------------------- kernel 1: LN1 + fused QKV + RoPE ----------------------
def _qkv_rope_kernel(x_ref, n1w_ref, n1b_ref, wqkv_ref, bqkv_ref,
                     cos_ref, sin_ref,
                     qlo_ref, qhi_ref, klo_ref, khi_ref, v_ref,
                     *, embed_dim):
    D = embed_dim
    D2 = D // 2

    x = x_ref[...].astype(F32)                                   # [Tr, D]
    h = _layer_norm(x, n1w_ref[...], n1b_ref[...])               # f32

    # One big [Tr, D] @ [D, 3D] matmul (bf16 in, f32 accumulate).
    qkv = jnp.dot(h.astype(BF16), wqkv_ref[...],
                  preferred_element_type=F32) + bqkv_ref[...]    # [Tr, 3D]

    q_lo, q_hi = qkv[:, 0:D2], qkv[:, D2:D]
    k_lo, k_hi = qkv[:, D:D + D2], qkv[:, D + D2:2 * D]
    v = qkv[:, 2 * D:3 * D]

    c = cos_ref[...]                                             # [Tr, D2]
    s = sin_ref[...]
    # RoPE on the split-halves layout: out_lo = lo*c - hi*s, out_hi = hi*c + lo*s
    qlo_ref[...] = (q_lo * c - q_hi * s).astype(qlo_ref.dtype)
    qhi_ref[...] = (q_hi * c + q_lo * s).astype(qhi_ref.dtype)
    klo_ref[...] = (k_lo * c - k_hi * s).astype(klo_ref.dtype)
    khi_ref[...] = (k_hi * c + k_lo * s).astype(khi_ref.dtype)
    v_ref[...] = v.astype(v_ref.dtype)


# ------------- kernel 2: block-diag SDPA + proj + LN2 + MLP + residuals ------
def _attn_mlp_kernel(cu_ref,                       # scalar prefetch (SMEM)
                     x_ref, qlo_ref, qhi_ref, klo_ref, khi_ref, v_ref,
                     n2w_ref, n2b_ref, wproj_ref, bproj_ref,
                     wfc1_ref, bfc1_ref, wfc2_ref, bfc2_ref,
                     out_ref,
                     *, num_heads, head_dim, embed_dim, q_tile, seq_len, num_cu):
    H, Dh, D = num_heads, head_dim, embed_dim
    dh2 = Dh // 2
    Tq, S = q_tile, seq_len

    # Block-diagonal mask built in-kernel from cu_seqlens (no [S,S] HBM bias).
    q_off = pl.program_id(0) * Tq
    row_pos = q_off + lax.broadcasted_iota(jnp.int32, (Tq, 1), 0)
    col_pos = lax.broadcasted_iota(jnp.int32, (1, S), 1)
    seg_r = jnp.zeros((Tq, 1), jnp.int32)
    seg_c = jnp.zeros((1, S), jnp.int32)
    for j in range(1, num_cu):                     # static, #segments is small
        b = cu_ref[j]
        seg_r = seg_r + (row_pos >= b).astype(jnp.int32)
        seg_c = seg_c + (col_pos >= b).astype(jnp.int32)
    bias = jnp.where(seg_r == seg_c, 0.0, _NEG_INF).astype(F32)  # [Tq, S]

    contract_last = (((1,), (1,)), ((), ()))       # q @ k^T without a .T copy

    # TODO(synk): for very long sequences add online-softmax tiling over the
    # key axis (flash) and tile the MLP hidden dim; here K/V and the MLP
    # weights stay whole-VMEM-resident (fine at these and moderate shapes).
    proj = jnp.zeros((Tq, D), F32)
    for h in range(H):
        s0 = h * dh2
        # 1/sqrt(Dh) is already folded into Wq on the host.
        scores = lax.dot_general(qlo_ref[:, s0:s0 + dh2], klo_ref[:, s0:s0 + dh2],
                                 contract_last, preferred_element_type=F32)
        scores = scores + lax.dot_general(qhi_ref[:, s0:s0 + dh2],
                                          khi_ref[:, s0:s0 + dh2],
                                          contract_last, preferred_element_type=F32)
        scores = scores + bias                                   # [Tq, S] f32

        m = jnp.max(scores, axis=-1, keepdims=True)
        p = jnp.exp(scores - m)
        denom = jnp.sum(p, axis=-1, keepdims=True)
        p = p * pl.reciprocal(denom, approx=True)                # EUP, not VALU

        oh = jnp.dot(p.astype(BF16), v_ref[:, h * Dh:(h + 1) * Dh],
                     preferred_element_type=F32)                 # [Tq, Dh]
        # Accumulate the output projection directly (no attn scratch).
        proj = proj + jnp.dot(oh.astype(BF16), wproj_ref[h],
                              preferred_element_type=F32)        # [Tq, D]

    x1 = x_ref[...].astype(F32) + proj + bproj_ref[...]

    h2 = _layer_norm(x1, n2w_ref[...], n2b_ref[...])
    a = jnp.dot(h2.astype(BF16), wfc1_ref[...],
                preferred_element_type=F32) + bfc1_ref[...]      # [Tq, Hd]
    a = a * jax.nn.sigmoid(a)                                    # SiLU (f32)
    mlp = jnp.dot(a.astype(BF16), wfc2_ref[...],
                  preferred_element_type=F32) + bfc2_ref[...]    # [Tq, D]

    out_ref[...] = (x1 + mlp).astype(out_ref.dtype)


# --------------------------------- wrapper -----------------------------------
def qwen2vl_vision_block(hidden_states, cu_seqlens, rotary_pos_emb, params,
                         *, num_heads, q_tile=None):
    """hidden_states: [S, D] f32, cu_seqlens: [n+1] int32,
    rotary_pos_emb: [S, head_dim // 2] f32, params: torch-layout weights."""
    S, D = hidden_states.shape
    H = num_heads
    Dh = D // H
    dh2 = Dh // 2
    D2 = D // 2
    Hd = params["fc1_w"].shape[0]
    num_cu = int(cu_seqlens.shape[0])

    if q_tile is None:
        q_tile = S if S < 128 else 128
    assert S % q_tile == 0, "seq_len must be divisible by the query tile"
    n_tiles = S // q_tile
    r_tile = q_tile

    # ---- host-side parameter preprocessing (pure layout work) ---------------
    # torch nn.Linear stores W as [out, in]; kernels compute y = x @ W + b.
    wq = params["qkv_w"][0 * D:1 * D, :].T
    wk = params["qkv_w"][1 * D:2 * D, :].T
    wv = params["qkv_w"][2 * D:3 * D, :].T
    bq = params["qkv_b"][0 * D:1 * D]
    bk = params["qkv_b"][1 * D:2 * D]
    bv = params["qkv_b"][2 * D:3 * D]

    # Permute q/k output columns: per-head [lo|hi]  ->  global [all-lo | all-hi]
    lo_idx = (np.arange(H)[:, None] * Dh + np.arange(dh2)[None, :]).reshape(-1)
    perm = np.concatenate([lo_idx, lo_idx + dh2])
    scale = 1.0 / math.sqrt(Dh)                    # fold SDPA scale into Wq/bq
    wq_p, bq_p = wq[:, perm] * scale, bq[perm] * scale
    wk_p, bk_p = wk[:, perm], bk[perm]

    wqkv = jnp.concatenate([wq_p, wk_p, wv], axis=1).astype(BF16)    # [D, 3D]
    bqkv = jnp.concatenate([bq_p, bk_p, bv])[None, :].astype(F32)    # [1, 3D]

    cos2 = jnp.tile(jnp.cos(rotary_pos_emb), (1, H)).astype(F32)     # [S, D2]
    sin2 = jnp.tile(jnp.sin(rotary_pos_emb), (1, H)).astype(F32)

    n1w = params["n1_w"][None, :].astype(F32)
    n1b = params["n1_b"][None, :].astype(F32)
    n2w = params["n2_w"][None, :].astype(F32)
    n2b = params["n2_b"][None, :].astype(F32)

    wproj = params["proj_w"].T.reshape(H, Dh, D).astype(BF16)        # [H, Dh, D]
    bproj = params["proj_b"][None, :].astype(F32)
    wfc1 = params["fc1_w"].T.astype(BF16)                            # [D, Hd]
    bfc1 = params["fc1_b"][None, :].astype(F32)
    wfc2 = params["fc2_w"].T.astype(BF16)                            # [Hd, D]
    bfc2 = params["fc2_b"][None, :].astype(F32)

    x = hidden_states.astype(F32)
    cu = cu_seqlens.astype(jnp.int32)

    cparams = pltpu.CompilerParams(dimension_semantics=("parallel",),
                                   vmem_limit_bytes=32 * 1024 * 1024)

    # ---- kernel 1: LN1 + fused QKV + RoPE ------------------------------------
    def k1_row(width):
        return pl.BlockSpec((r_tile, width), lambda i: (i, 0))

    def k1_full(shape):
        zeros = (0,) * len(shape)
        return pl.BlockSpec(shape, lambda i: zeros)

    k1_bytes = (S * D * 4 + 2 * D * 4 + D * 3 * D * 2 + 3 * D * 4
                + 2 * S * D2 * 4 + (4 * S * D2 + S * D) * 2)
    q_lo, q_hi, k_lo, k_hi, v = pl.pallas_call(
        partial(_qkv_rope_kernel, embed_dim=D),
        grid=(n_tiles,),
        in_specs=[
            k1_row(D),                                # x
            k1_full((1, D)), k1_full((1, D)),         # norm1 w, b
            k1_full((D, 3 * D)), k1_full((1, 3 * D)), # wqkv (resident), bqkv
            k1_row(D2), k1_row(D2),                   # cos, sin (split layout)
        ],
        out_specs=[k1_row(D2), k1_row(D2), k1_row(D2), k1_row(D2), k1_row(D)],
        out_shape=[
            jax.ShapeDtypeStruct((S, D2), BF16),      # q_lo (rotated)
            jax.ShapeDtypeStruct((S, D2), BF16),      # q_hi (rotated)
            jax.ShapeDtypeStruct((S, D2), BF16),      # k_lo (rotated)
            jax.ShapeDtypeStruct((S, D2), BF16),      # k_hi (rotated)
            jax.ShapeDtypeStruct((S, D), BF16),       # v
        ],
        compiler_params=cparams,
        cost_estimate=pl.CostEstimate(flops=int(2 * S * D * 3 * D),
                                      transcendentals=0,
                                      bytes_accessed=int(k1_bytes)),
    )(x, n1w, n1b, wqkv, bqkv, cos2, sin2)

    # ---- kernel 2: attention + proj + LN2 + MLP ------------------------------
    def k2_row(width):
        return pl.BlockSpec((q_tile, width), lambda i, cu_ref: (i, 0))

    def k2_full(shape):
        zeros = (0,) * len(shape)
        return pl.BlockSpec(shape, lambda i, cu_ref: zeros)

    grid_spec = pltpu.PrefetchScalarGridSpec(
        num_scalar_prefetch=1,
        grid=(n_tiles,),
        in_specs=[
            k2_row(D),                                # x (residual)
            k2_row(D2), k2_row(D2),                   # q_lo, q_hi (this tile)
            k2_full((S, D2)), k2_full((S, D2)),       # k_lo, k_hi (resident)
            k2_full((S, D)),                          # v (resident)
            k2_full((1, D)), k2_full((1, D)),         # norm2 w, b
            k2_full((H, Dh, D)), k2_full((1, D)),     # wproj, bproj
            k2_full((D, Hd)), k2_full((1, Hd)),       # wfc1, bfc1
            k2_full((Hd, D)), k2_full((1, D)),        # wfc2, bfc2
        ],
        out_specs=pl.BlockSpec((q_tile, D), lambda i, cu_ref: (i, 0)),
    )

    k2_flops = 4 * S * S * D + 2 * S * D * D + 4 * S * D * Hd
    k2_bytes = (S * D * 4 + (4 * S * D2 + S * D) * 2 + D * D * 2
                + 2 * D * Hd * 2 + num_cu * 4 + 6 * D * 4 + Hd * 4 + S * D * 4)
    out = pl.pallas_call(
        partial(_attn_mlp_kernel, num_heads=H, head_dim=Dh, embed_dim=D,
                q_tile=q_tile, seq_len=S, num_cu=num_cu),
        grid_spec=grid_spec,
        out_shape=jax.ShapeDtypeStruct((S, D), hidden_states.dtype),
        compiler_params=cparams,
        cost_estimate=pl.CostEstimate(flops=int(k2_flops),
                                      transcendentals=int(H * S * S + S * Hd),
                                      bytes_accessed=int(k2_bytes)),
    )(cu, x, q_lo, q_hi, k_lo, k_hi, v,
      n2w, n2b, wproj, bproj, wfc1, bfc1, wfc2, bfc2)
    return out


# ----------------------------- pure-JAX reference ----------------------------
def reference_block(x, cu_seqlens, freqs, p, *, num_heads):
    S, D = x.shape
    H = num_heads
    Dh = D // H

    def ln(v, w, b):
        mu = v.mean(-1, keepdims=True)
        var = ((v - mu) ** 2).mean(-1, keepdims=True)
        return (v - mu) / jnp.sqrt(var + 1e-6) * w + b

    h = ln(x, p["n1_w"], p["n1_b"])
    qkv = h @ p["qkv_w"].T + p["qkv_b"]
    q = qkv[:, :D].reshape(S, H, Dh)
    k = qkv[:, D:2 * D].reshape(S, H, Dh)
    v = qkv[:, 2 * D:].reshape(S, H, Dh)

    cosf = jnp.tile(jnp.cos(freqs), (1, 2))[:, None, :]      # [S, 1, Dh]
    sinf = jnp.tile(jnp.sin(freqs), (1, 2))[:, None, :]

    def rope(t):
        t1, t2 = t[..., :Dh // 2], t[..., Dh // 2:]
        rot = jnp.concatenate([-t2, t1], axis=-1)
        return t * cosf + rot * sinf

    q, k = rope(q), rope(k)

    pos = jnp.arange(S)
    seg = jnp.searchsorted(cu_seqlens[1:], pos, side="right")
    mask = seg[:, None] == seg[None, :]

    scores = jnp.einsum("shd,thd->hst", q, k) / math.sqrt(Dh)
    scores = jnp.where(mask[None], scores, -jnp.inf)
    pr = jax.nn.softmax(scores, axis=-1)
    o = jnp.einsum("hst,thd->shd", pr, v).reshape(S, D)
    x1 = x + (o @ p["proj_w"].T + p["proj_b"])

    h2 = ln(x1, p["n2_w"], p["n2_b"])
    a = h2 @ p["fc1_w"].T + p["fc1_b"]
    a = a * jax.nn.sigmoid(a)
    return x1 + (a @ p["fc2_w"].T + p["fc2_b"])


# ------------------------------------ main ------------------------------------
if __name__ == "__main__":
    # Small config consistent with Qwen2VLVisionBlock:
    #   embed_dim=32, num_heads=4 (head_dim=8), mlp_ratio=4 -> mlp_hidden=128
    S, D, H = 8, 32, 4
    Dh = D // H
    Hd = int(D * 4)

    key = jax.random.PRNGKey(0)
    ks = jax.random.split(key, 16)

    def rnd(k, shape, scale=0.05):
        return (scale * jax.random.normal(k, shape)).astype(jnp.float32)

    # Parameters in PyTorch nn.Linear / LayerNorm layout ([out, in] weights).
    params = {
        "n1_w": 1.0 + rnd(ks[0], (D,)), "n1_b": rnd(ks[1], (D,)),
        "n2_w": 1.0 + rnd(ks[2], (D,)), "n2_b": rnd(ks[3], (D,)),
        "qkv_w": rnd(ks[4], (3 * D, D)), "qkv_b": rnd(ks[5], (3 * D,)),
        "proj_w": rnd(ks[6], (D, D)), "proj_b": rnd(ks[7], (D,)),
        "fc1_w": rnd(ks[8], (Hd, D)), "fc1_b": rnd(ks[9], (Hd,)),
        "fc2_w": rnd(ks[10], (D, Hd)), "fc2_b": rnd(ks[11], (D,)),
    }

    x = rnd(ks[12], (S, D), scale=1.0)                     # hidden_states
    freqs = rnd(ks[13], (S, Dh // 2), scale=1.0)           # rotary_pos_emb
    cu_seqlens = jnp.array([0, 4, 8], dtype=jnp.int32)     # two segments

    out = qwen2vl_vision_block(x, cu_seqlens, freqs, params, num_heads=H)
    out = jax.block_until_ready(out)

    ref = reference_block(x, cu_seqlens, freqs, params, num_heads=H)
    ref = jax.block_until_ready(ref)

    assert out.shape == (S, D) and out.dtype == jnp.float32
    assert not bool(jnp.any(jnp.isnan(out)))
    err = float(jnp.max(jnp.abs(out - ref)))
    # bf16 matmul operands (f32 accumulate) vs f32 reference -> modest tolerance.
    assert bool(jnp.allclose(out, ref, rtol=2e-2, atol=5e-3)), f"max abs err = {err}"

    print("KERNEL_OK")
</pallas_src>

<mosaic_0001>
module attributes {stable_mosaic.version = 11 : i64} {
  func.func @_qkv_rope_kernel(%arg0: i32, %arg1: memref<8x32xf32, #tpu.memory_space<vmem>>, %arg2: memref<1x32xf32, #tpu.memory_space<vmem>>, %arg3: memref<1x32xf32, #tpu.memory_space<vmem>>, %arg4: memref<32x96xbf16, #tpu.memory_space<vmem>>, %arg5: memref<1x96xf32, #tpu.memory_space<vmem>>, %arg6: memref<8x16xf32, #tpu.memory_space<vmem>>, %arg7: memref<8x16xf32, #tpu.memory_space<vmem>>, %arg8: memref<8x16xbf16, #tpu.memory_space<vmem>>, %arg9: memref<8x16xbf16, #tpu.memory_space<vmem>>, %arg10: memref<8x16xbf16, #tpu.memory_space<vmem>>, %arg11: memref<8x16xbf16, #tpu.memory_space<vmem>>, %arg12: memref<8x32xbf16, #tpu.memory_space<vmem>>) attributes {dimension_semantics = [#tpu.dimension_semantics<parallel>], iteration_bounds = array<i64: 1>, scalar_prefetch = 0 : i64, scratch_operands = 0 : i64, tpu.core_type = #tpu.core_type<tc>, window_params = [{transform_indices = @transform_0, window_bounds = array<i64: 8, 32>}, {pipeline_mode = #tpu.pipeline_mode<synchronous>, transform_indices = @transform_1, window_bounds = array<i64: 1, 32>}, {pipeline_mode = #tpu.pipeline_mode<synchronous>, transform_indices = @transform_2, window_bounds = array<i64: 1, 32>}, {pipeline_mode = #tpu.pipeline_mode<synchronous>, transform_indices = @transform_3, window_bounds = array<i64: 32, 96>}, {pipeline_mode = #tpu.pipeline_mode<synchronous>, transform_indices = @transform_4, window_bounds = array<i64: 1, 96>}, {transform_indices = @transform_5, window_bounds = array<i64: 8, 16>}, {transform_indices = @transform_6, window_bounds = array<i64: 8, 16>}, {transform_indices = @transform_7, window_bounds = array<i64: 8, 16>}, {transform_indices = @transform_8, window_bounds = array<i64: 8, 16>}, {transform_indices = @transform_9, window_bounds = array<i64: 8, 16>}, {transform_indices = @transform_10, window_bounds = array<i64: 8, 16>}, {transform_indices = @transform_11, window_bounds = array<i64: 8, 32>}]} {
    %c0 = arith.constant 0 : index
    %c0_0 = arith.constant 0 : index
    %0 = vector.load %arg1[%c0, %c0_0] : memref<8x32xf32, #tpu.memory_space<vmem>>, vector<8x32xf32>
    %c0_1 = arith.constant 0 : index
    %c0_2 = arith.constant 0 : index
    %1 = vector.load %arg2[%c0_1, %c0_2] : memref<1x32xf32, #tpu.memory_space<vmem>>, vector<1x32xf32>
    %c0_3 = arith.constant 0 : index
    %c0_4 = arith.constant 0 : index
    %2 = vector.load %arg3[%c0_3, %c0_4] : memref<1x32xf32, #tpu.memory_space<vmem>>, vector<1x32xf32>
    %cst = arith.constant dense<0.000000e+00> : vector<8xf32>
    %3 = vector.multi_reduction <add>, %0, %cst [1] : vector<8x32xf32> to vector<8xf32>
    %4 = vector.shape_cast %3 : vector<8xf32> to vector<8x1xf32>
    %cst_5 = arith.constant 3.200000e+01 : f32
    %5 = vector.broadcast %cst_5 : f32 to vector<8x1xf32>
    %6 = arith.divf %4, %5 : vector<8x1xf32>
    %7 = vector.broadcast %6 : vector<8x1xf32> to vector<8x32xf32>
    %8 = arith.subf %0, %7 : vector<8x32xf32>
    %9 = arith.mulf %8, %8 : vector<8x32xf32>
    %cst_6 = arith.constant dense<0.000000e+00> : vector<8xf32>
    %10 = vector.multi_reduction <add>, %9, %cst_6 [1] : vector<8x32xf32> to vector<8xf32>
    %11 = vector.shape_cast %10 : vector<8xf32> to vector<8x1xf32>
    %cst_7 = arith.constant 3.200000e+01 : f32
    %12 = vector.broadcast %cst_7 : f32 to vector<8x1xf32>
    %13 = arith.divf %11, %12 : vector<8x1xf32>
    %cst_8 = arith.constant 9.99999997E-7 : f32
    %14 = vector.broadcast %cst_8 : f32 to vector<8x1xf32>
    %15 = arith.addf %13, %14 : vector<8x1xf32>
    %16 = math.rsqrt %15 : vector<8x1xf32>
    %17 = vector.broadcast %16 : vector<8x1xf32> to vector<8x32xf32>
    %18 = arith.mulf %8, %17 : vector<8x32xf32>
    %19 = vector.broadcast %1 : vector<1x32xf32> to vector<8x32xf32>
    %20 = arith.mulf %18, %19 : vector<8x32xf32>
    %21 = vector.broadcast %2 : vector<1x32xf32> to vector<8x32xf32>
    %22 = arith.addf %20, %21 : vector<8x32xf32>
    %23 = arith.truncf %22 : vector<8x32xf32> to vector<8x32xbf16>
    %c0_9 = arith.constant 0 : index
    %c0_10 = arith.constant 0 : index
    %24 = vector.load %arg4[%c0_9, %c0_10] : memref<32x96xbf16, #tpu.memory_space<vmem>>, vector<32x96xbf16>
    %cst_11 = arith.constant dense<0.000000e+00> : vector<8x96xf32>
    %25 = tpu.matmul %23, %24, %cst_11 {dimension_numbers = #tpu.dot_dimension_numbers<[1], [0], [0], [1], [0, 0, 1, 1], [], []>} : vector<8x32xbf16>, vector<32x96xbf16>, vector<8x96xf32> -> vector<8x96xf32>
    %c0_12 = arith.constant 0 : index
    %c0_13 = arith.constant 0 : index
    %26 = vector.load %arg5[%c0_12, %c0_13] : memref<1x96xf32, #tpu.memory_space<vmem>>, vector<1x96xf32>
    %27 = vector.broadcast %26 : vector<1x96xf32> to vector<8x96xf32>
    %28 = arith.addf %25, %27 : vector<8x96xf32>
    %29 = vector.extract_strided_slice %28 {offsets = [0, 0], sizes = [8, 16], strides = [1, 1]} : vector<8x96xf32> to vector<8x16xf32>
    %30 = vector.extract_strided_slice %28 {offsets = [0, 16], sizes = [8, 16], strides = [1, 1]} : vector<8x96xf32> to vector<8x16xf32>
    %31 = vector.extract_strided_slice %28 {offsets = [0, 32], sizes = [8, 16], strides = [1, 1]} : vector<8x96xf32> to vector<8x16xf32>
    %32 = vector.extract_strided_slice %28 {offsets = [0, 48], sizes = [8, 16], strides = [1, 1]} : vector<8x96xf32> to vector<8x16xf32>
    %33 = vector.extract_strided_slice %28 {offsets = [0, 64], sizes = [8, 32], strides = [1, 1]} : vector<8x96xf32> to vector<8x32xf32>
    %c0_14 = arith.constant 0 : index
    %c0_15 = arith.constant 0 : index
    %34 = vector.load %arg6[%c0_14, %c0_15] : memref<8x16xf32, #tpu.memory_space<vmem>>, vector<8x16xf32>
    %c0_16 = arith.constant 0 : index
    %c0_17 = arith.constant 0 : index
    %35 = vector.load %arg7[%c0_16, %c0_17] : memref<8x16xf32, #tpu.memory_space<vmem>>, vector<8x16xf32>
    %36 = arith.mulf %29, %34 : vector<8x16xf32>
    %37 = arith.mulf %30, %35 : vector<8x16xf32>
    %38 = arith.subf %36, %37 : vector<8x16xf32>
    %39 = arith.truncf %38 : vector<8x16xf32> to vector<8x16xbf16>
    %c0_18 = arith.constant 0 : index
    %c0_19 = arith.constant 0 : index
    %40 = vector.load %arg8[%c0_18, %c0_19] : memref<8x16xbf16, #tpu.memory_space<vmem>>, vector<8x16xbf16>
    tpu.vector_store %arg8[%c0_18, %c0_19], %39 {strides = array<i32>} : memref<8x16xbf16, #tpu.memory_space<vmem>>, vector<8x16xbf16>,
    %41 = arith.mulf %30, %34 : vector<8x16xf32>
    %42 = arith.mulf %29, %35 : vector<8x16xf32>
    %43 = arith.addf %41, %42 : vector<8x16xf32>
    %44 = arith.truncf %43 : vector<8x16xf32> to vector<8x16xbf16>
    %c0_20 = arith.constant 0 : index
    %c0_21 = arith.constant 0 : index
    %45 = vector.load %arg9[%c0_20, %c0_21] : memref<8x16xbf16, #tpu.memory_space<vmem>>, vector<8x16xbf16>
    tpu.vector_store %arg9[%c0_20, %c0_21], %44 {strides = array<i32>} : memref<8x16xbf16, #tpu.memory_space<vmem>>, vector<8x16xbf16>,
    %46 = arith.mulf %31, %34 : vector<8x16xf32>
    %47 = arith.mulf %32, %35 : vector<8x16xf32>
    %48 = arith.subf %46, %47 : vector<8x16xf32>
    %49 = arith.truncf %48 : vector<8x16xf32> to vector<8x16xbf16>
    %c0_22 = arith.constant 0 : index
    %c0_23 = arith.constant 0 : index
    %50 = vector.load %arg10[%c0_22, %c0_23] : memref<8x16xbf16, #tpu.memory_space<vmem>>, vector<8x16xbf16>
    tpu.vector_store %arg10[%c0_22, %c0_23], %49 {strides = array<i32>} : memref<8x16xbf16, #tpu.memory_space<vmem>>, vector<8x16xbf16>,
    %51 = arith.mulf %32, %34 : vector<8x16xf32>
    %52 = arith.mulf %31, %35 : vector<8x16xf32>
    %53 = arith.addf %51, %52 : vector<8x16xf32>
    %54 = arith.truncf %53 : vector<8x16xf32> to vector<8x16xbf16>
    %c0_24 = arith.constant 0 : index
    %c0_25 = arith.constant 0 : index
    %55 = vector.load %arg11[%c0_24, %c0_25] : memref<8x16xbf16, #tpu.memory_space<vmem>>, vector<8x16xbf16>
    tpu.vector_store %arg11[%c0_24, %c0_25], %54 {strides = array<i32>} : memref<8x16xbf16, #tpu.memory_space<vmem>>, vector<8x16xbf16>,
    %56 = arith.truncf %33 : vector<8x32xf32> to vector<8x32xbf16>
    %c0_26 = arith.constant 0 : index
    %c0_27 = arith.constant 0 : index
    %57 = vector.load %arg12[%c0_26, %c0_27] : memref<8x32xbf16, #tpu.memory_space<vmem>>, vector<8x32xbf16>
    tpu.vector_store %arg12[%c0_26, %c0_27], %56 {strides = array<i32>} : memref<8x32xbf16, #tpu.memory_space<vmem>>, vector<8x32xbf16>,
    return
  }
  func.func @transform_0(%arg0: i32) -> (i32, i32) {
    %c0_i32 = arith.constant 0 : i32
    %c0_i32_0 = arith.constant 0 : i32
    return %arg0, %c0_i32 : i32, i32
  }
  func.func @transform_1(%arg0: i32) -> (i32, i32) {
    %c0_i32 = arith.constant 0 : i32
    %c0_i32_0 = arith.constant 0 : i32
    %c0_i32_1 = arith.constant 0 : i32
    return %c0_i32, %c0_i32_0 : i32, i32
  }
  func.func @transform_2(%arg0: i32) -> (i32, i32) {
    %c0_i32 = arith.constant 0 : i32
    %c0_i32_0 = arith.constant 0 : i32
    %c0_i32_1 = arith.constant 0 : i32
    return %c0_i32, %c0_i32_0 : i32, i32
  }
  func.func @transform_3(%arg0: i32) -> (i32, i32) {
    %c0_i32 = arith.constant 0 : i32
    %c0_i32_0 = arith.constant 0 : i32
    %c0_i32_1 = arith.constant 0 : i32
    return %c0_i32, %c0_i32_0 : i32, i32
  }
  func.func @transform_4(%arg0: i32) -> (i32, i32) {
    %c0_i32 = arith.constant 0 : i32
    %c0_i32_0 = arith.constant 0 : i32
    %c0_i32_1 = arith.constant 0 : i32
    return %c0_i32, %c0_i32_0 : i32, i32
  }
  func.func @transform_5(%arg0: i32) -> (i32, i32) {
    %c0_i32 = arith.constant 0 : i32
    %c0_i32_0 = arith.constant 0 : i32
    return %arg0, %c0_i32 : i32, i32
  }
  func.func @transform_6(%arg0: i32) -> (i32, i32) {
    %c0_i32 = arith.constant 0 : i32
    %c0_i32_0 = arith.constant 0 : i32
    return %arg0, %c0_i32 : i32, i32
  }
  func.func @transform_7(%arg0: i32) -> (i32, i32) {
    %c0_i32 = arith.constant 0 : i32
    %c0_i32_0 = arith.constant 0 : i32
    return %arg0, %c0_i32 : i32, i32
  }
  func.func @transform_8(%arg0: i32) -> (i32, i32) {
    %c0_i32 = arith.constant 0 : i32
    %c0_i32_0 = arith.constant 0 : i32
    return %arg0, %c0_i32 : i32, i32
  }
  func.func @transform_9(%arg0: i32) -> (i32, i32) {
    %c0_i32 = arith.constant 0 : i32
    %c0_i32_0 = arith.constant 0 : i32
    return %arg0, %c0_i32 : i32, i32
  }
  func.func @transform_10(%arg0: i32) -> (i32, i32) {
    %c0_i32 = arith.constant 0 : i32
    %c0_i32_0 = arith.constant 0 : i32
    return %arg0, %c0_i32 : i32, i32
  }
  func.func @transform_11(%arg0: i32) -> (i32, i32) {
    %c0_i32 = arith.constant 0 : i32
    %c0_i32_0 = arith.constant 0 : i32
    return %arg0, %c0_i32 : i32, i32
  }
}

</mosaic_0001>

<llo_original>
// kernel: tpu_custom_call.1
$region0: #{tpu_custom_call.1}
  #allocation0 [shape = 'u32[]', space=smem, size = 0x4, offset = 0x4, fixed_abs, tag = 'smem constant byte address 0x4 - core index']
  #allocation1 [shape = 'u32[72,128]{1,0:T(1,128)}', space=vmem, size = 0x9000, scoped, tag = 'internal scratch']
  %s0 = inlined_call_operand.hbm [shape: f32[8,32], index: 0, kind: input, shape index: {}]
  %s1 = inlined_call_operand.hbm [shape: f32[1,32], index: 1, kind: input, shape index: {}]
  %s2 = inlined_call_operand.vmem [shape: f32[1,32], index: 2, kind: input, shape index: {}]
  %s3 = inlined_call_operand.hbm [shape: bf16[32,96], index: 3, kind: input, shape index: {}]
  %s4 = inlined_call_operand.vmem [shape: f32[1,96], index: 4, kind: input, shape index: {}]
  %s5 = inlined_call_operand.hbm [shape: f32[8,16], index: 5, kind: input, shape index: {}]
  %s6 = inlined_call_operand.hbm [shape: f32[8,16], index: 6, kind: input, shape index: {}]
  %s7 = inlined_call_operand.hbm [shape: bf16[8,16], index: 7, kind: output, shape index: {0}]
  %s8 = inlined_call_operand.hbm [shape: bf16[8,16], index: 8, kind: output, shape index: {1}]
  %s9 = inlined_call_operand.hbm [shape: bf16[8,16], index: 9, kind: output, shape index: {2}]
  %s10 = inlined_call_operand.hbm [shape: bf16[8,16], index: 10, kind: output, shape index: {3}]
  %s11 = inlined_call_operand.hbm [shape: bf16[8,32], index: 11, kind: output, shape index: {4}]
  %12 = xla_tuple %s7, %s8, %s9, %s10, %s11
  %s13 = sld [smem:[#allocation0]]
  $region90: #{tpu_custom_call.1} parent=0
    _
  %s15 = ssub.s32 1, %s13
  %s16 = scalar_select 0, %s15, %s13
  $region1: #{tpu_custom_call.1} parent=0
    #allocation2 [shape = 'u8[4096]{0}', space=vmem, size = 0x1000, scoped, tag = 'input window, operand 0, single buffered']
    #allocation3 [shape = 's32[1]{0}', space=sflag, size = 0x4, scoped, tag = 'scoped memory for tpu_custom_call.1']
    #allocation4 [shape = 's32[1]{0}', space=sflag, size = 0x4, scoped, tag = 'scoped memory for tpu_custom_call.1']
    #allocation5 [shape = 'u8[512]{0}', space=vmem, size = 0x400, scoped, tag = 'input window, operand 1, single buffered']
    #allocation6 [shape = 's32[1]{0}', space=sflag, size = 0x4, scoped, tag = 'scoped memory for tpu_custom_call.1']
    #allocation7 [shape = 'u8[8192]{0}', space=vmem, size = 0x2000, scoped, tag = 'input window, operand 3, single buffered']
    #allocation8 [shape = 'u8[4096]{0}', space=vmem, size = 0x1000, scoped, tag = 'input window, operand 5, single buffered']
    #allocation9 [shape = 's32[1]{0}', space=sflag, size = 0x4, scoped, tag = 'scoped memory for tpu_custom_call.1']
    #allocation10 [shape = 'u8[4096]{0}', space=vmem, size = 0x1000, scoped, tag = 'input window, operand 6, single buffered']
    #allocation11 [shape = 'u8[2048]{0}', space=vmem, size = 0x800, scoped, tag = 'output window, operand 0, single buffered']
    #allocation12 [shape = 'u8[2048]{0}', space=vmem, size = 0x800, scoped, tag = 'output window, operand 1, single buffered']
    #allocation13 [shape = 's32[1]{0}', space=sflag, size = 0x4, scoped, tag = 'scoped memory for tpu_custom_call.1']
    #allocation14 [shape = 'u8[2048]{0}', space=vmem, size = 0x800, scoped, tag = 'output window, operand 2, single buffered']
    #allocation15 [shape = 'u8[2048]{0}', space=vmem, size = 0x800, scoped, tag = 'output window, operand 3, single buffered']
    #allocation16 [shape = 's32[1]{0}', space=sflag, size = 0x4, scoped, tag = 'scoped memory for tpu_custom_call.1']
    #allocation17 [shape = 'u8[2048]{0}', space=vmem, size = 0x800, scoped, tag = 'output window, operand 4, single buffered']
    %17 = vsyncpa [#allocation3], 0
    %18 = vsyncpa [#allocation6], 0
    %19 = vsyncpa [#allocation9], 0
    %20 = vsyncpa [#allocation4], 0
    %21 = vsyncpa [#allocation13], 0
    %22 = vsyncpa [#allocation16], 0
    // Predicated region
    $region2: #{tpu_custom_call.1} parent=1 // pred_check
      _
    $region3: #{tpu_custom_call.1} parent=1 // pred_check_branch
      %24 = sbr.rel (0) target = $region5
    $region4: #{tpu_custom_call.1} parent=1 // pred_region
      %26 = vsyncadd [#allocation3], 0
      %s28 = sshll.u32 %s0, 4
      %s29 = int_to_ptr.hbm [resolvable:$true] %s28
      %s30 = sshll.u32 [#allocation2], 4
      %s31 = int_to_ptr.vmem [resolvable:$true] %s30
      %33 = dma.hbm_to_vmem [thread:$0]  %s29, 128, %s31, [#allocation3]
    $region5: #{tpu_custom_call.1} parent=1 // pred_fallthru
      _
    // Predicated region
    $region6: #{tpu_custom_call.1} parent=1 // pred_check
      _
    $region7: #{tpu_custom_call.1} parent=1 // pred_check_branch
      %35 = sbr.rel (0) target = $region9
    $region8: #{tpu_custom_call.1} parent=1 // pred_region
      %37 = vsyncadd [#allocation6], 0
      %s39 = sshll.u32 %s1, 4
      %s40 = int_to_ptr.hbm [resolvable:$true] %s39
      %s41 = sshll.u32 [#allocation5], 4
      %s42 = int_to_ptr.vmem [resolvable:$true] %s41
      %44 = dma.hbm_to_vmem [thread:$0]  %s40, 16, %s42, [#allocation6]
    $region9: #{tpu_custom_call.1} parent=1 // pred_fallthru
      _
    // Predicated region
    $region10: #{tpu_custom_call.1} parent=1 // pred_check
      _
    $region11: #{tpu_custom_call.1} parent=1 // pred_check_branch
      %46 = sbr.rel (0) target = $region13
    $region12: #{tpu_custom_call.1} parent=1 // pred_region
      _
    $region13: #{tpu_custom_call.1} parent=1 // pred_fallthru
      _
    // Predicated region
    $region14: #{tpu_custom_call.1} parent=1 // pred_check
      _
    $region15: #{tpu_custom_call.1} parent=1 // pred_check_branch
      %48 = sbr.rel (0) target = $region17
    $region16: #{tpu_custom_call.1} parent=1 // pred_region
      %50 = vsyncadd [#allocation6], 0
      %s51 = sshll.u32 %s3, 4
      %s52 = int_to_ptr.hbm [resolvable:$true] %s51
      %s53 = sshll.u32 [#allocation7], 4
      %s54 = int_to_ptr.vmem [resolvable:$true] %s53
      %59 = dma.hbm_to_vmem [thread:$0]  %s52, 256, %s54, [#allocation6], 64, 64, 4
    $region17: #{tpu_custom_call.1} parent=1 // pred_fallthru
      _
    // Predicated region
    $region18: #{tpu_custom_call.1} parent=1 // pred_check
      _
    $region19: #{tpu_custom_call.1} parent=1 // pred_check_branch
      %61 = sbr.rel (0) target = $region21
    $region20: #{tpu_custom_call.1} parent=1 // pred_region
      _
    $region21: #{tpu_custom_call.1} parent=1 // pred_fallthru
      _
    // Predicated region
    $region22: #{tpu_custom_call.1} parent=1 // pred_check
      _
    $region23: #{tpu_custom_call.1} parent=1 // pred_check_branch
      %63 = sbr.rel (0) target = $region25
    $region24: #{tpu_custom_call.1} parent=1 // pred_region
      %65 = vsyncadd [#allocation9], 0
      %s67 = sshll.u32 %s5, 4
      %s68 = int_to_ptr.hbm [resolvable:$true] %s67
      %s69 = sshll.u32 [#allocation8], 4
      %s70 = int_to_ptr.vmem [resolvable:$true] %s69
      %72 = dma.hbm_to_vmem [thread:$0]  %s68, 128, %s70, [#allocation9]
    $region25: #{tpu_custom_call.1} parent=1 // pred_fallthru
      _
    // Predicated region
    $region26: #{tpu_custom_call.1} parent=1 // pred_check
      _
    $region27: #{tpu_custom_call.1} parent=1 // pred_check_branch
      %74 = sbr.rel (0) target = $region29
    $region28: #{tpu_custom_call.1} parent=1 // pred_region
      %76 = vsyncadd [#allocation9], 0
      %s78 = sshll.u32 %s6, 4
      %s79 = int_to_ptr.hbm [resolvable:$true] %s78
      %s80 = sshll.u32 [#allocation10], 4
      %s81 = int_to_ptr.vmem [resolvable:$true] %s80
      %83 = dma.hbm_to_vmem [thread:$0]  %s79, 128, %s81, [#allocation9]
    $region29: #{tpu_custom_call.1} parent=1 // pred_fallthru
      _
    // Predicated region
    $region30: #{tpu_custom_call.1} parent=1 // pred_check
      _
    $region31: #{tpu_custom_call.1} parent=1 // pred_check_branch
      %85 = sbr.rel (0) target = $region33
    $region32: #{tpu_custom_call.1} parent=1 // pred_region
      %87 = dma.done [#allocation3], 128
    $region33: #{tpu_custom_call.1} parent=1 // pred_fallthru
      _
    // Predicated region
    $region34: #{tpu_custom_call.1} parent=1 // pred_check
      _
    $region35: #{tpu_custom_call.1} parent=1 // pred_check_branch
      %89 = sbr.rel (0) target = $region37
    $region36: #{tpu_custom_call.1} parent=1 // pred_region
      %91 = dma.done [#allocation6], 16
    $region37: #{tpu_custom_call.1} parent=1 // pred_fallthru
      _
    // Predicated region
    $region38: #{tpu_custom_call.1} parent=1 // pred_check
      _
    $region39: #{tpu_custom_call.1} parent=1 // pred_check_branch
      %93 = sbr.rel (0) target = $region41
    $region40: #{tpu_custom_call.1} parent=1 // pred_region
      %95 = dma.done [#allocation6], 256
    $region41: #{tpu_custom_call.1} parent=1 // pred_fallthru
      _
    // Predicated region
    $region42: #{tpu_custom_call.1} parent=1 // pred_check
      _
    $region43: #{tpu_custom_call.1} parent=1 // pred_check_branch
      %97 = sbr.rel (0) target = $region45
    $region44: #{tpu_custom_call.1} parent=1 // pred_region
      %99 = dma.done [#allocation9], 128
    $region45: #{tpu_custom_call.1} parent=1 // pred_fallthru
      _
    // Predicated region
    $region46: #{tpu_custom_call.1} parent=1 // pred_check
      _
    $region47: #{tpu_custom_call.1} parent=1 // pred_check_branch
      %101 = sbr.rel (0) target = $region49
    $region48: #{tpu_custom_call.1} parent=1 // pred_region
      %103 = dma.done [#allocation9], 128
    $region49: #{tpu_custom_call.1} parent=1 // pred_fallthru
      _
    %v105 = vld [vmem:[#allocation2] sm:$0xff]
    %v106 = vld [vmem:[#allocation5] sm:$0x1]
    %v107 = vld [vmem:[%s2] sm:$0x1]
    %vm108 = vcmask 261120
    %v109 = vsel %vm108, %v105, 0.0
    %110 = vadd.xlane.f32.xlu0 %v109
    %v111 = vpop.xlane.xlu0 %110
    %v112 = vrcp.pop 32.0
    %v113 = vmul.f32 32.0, %v112
    %v114 = vsub.f32 1.0, %v113
    %v115 = vmul.f32 %v112, %v114
    %v116 = vadd.f32 %v112, %v115
    %vm117 = vweird.f32 %v112
    %v118 = vsel %vm117, %v112, %v116
    %v119 = vmul.f32 %v111, %v118
    %v120 = vsub.f32 %v105, %v119
    %v121 = vmul.f32 %v120, %v120
    %v122 = vsel %vm108, %v121, 0.0
    %123 = vadd.xlane.f32.xlu0 %v122
    %v124 = vpop.xlane.xlu0 %123
    %v125 = vmul.f32 %v124, %v118
    %v126 = vadd.f32 %v125, 1e-06
    %v127 = vrsqrt.pop %v126
    %v128 = vmul.f32 %v127, %v126
    %v129 = vmul.f32 %v128, %v127
    %v130 = vmul.f32 0.5, %v129
    %v131 = vsub.f32 1.5, %v130
    %v132 = vmul.f32 %v127, %v131
    %vm133 = vweird.f32 %v126
    %vm134 = vweird.f32 %v127
    %vm135 = vmor %vm133, %vm134
    %v136 = vsel %vm135, %v127, %v132
    %v137 = vmul.f32 %v120, %v136
    %v139 = vperm.slane %v106, 0
    %v141 = vmul.f32 %v137, %v139
    %v143 = vperm.slane %v107, 0
    %v145 = vadd.f32 %v141, %v143
    %v146 = vpack.c.bf16 %v145, %v145
    %v147 = vld [vmem:[#allocation7] sm:$0xf]
    %v148 = vld [vmem:[#allocation7 + $0x4] sm:$0xf]
    %v149 = vld [vmem:[#allocation7 + $0x8] sm:$0xf]
    %v150 = vld [vmem:[#allocation7 + $0xc] sm:$0xf]
    %v151 = vld [vmem:[%s4] sm:$0x1]
    %v153 = vperm.slane %v151, 0
    %v159 = vunpack.c.l.b16 %v147
    %v160 = vunpack.c.l.b16 %v148
    %v161 = vunpack.c.l.b16 %v149
    %v162 = vunpack.c.l.b16 %v150
    %v163 = vpack.c.b16 %v160, %v159
    %v164 = vpack.c.b16 %v162, %v161
    %v168 = vsel %vm108, %v146, 0
    %170 = vmatpush.bf16.msra.mxu0 0
    %171 = vmatpush.bf16.msra.mxu0 0
    %172 = vmatpush.bf16.msra.mxu0 0
    %173 = vmatpush.bf16.msra.mxu0 0
    %174 = vmatpush.bf16.msra.mxu0 0
    %175 = vmatpush.bf16.msra.mxu0 0
    %176 = vmatpush.bf16.msra.mxu0 %v164
    %177 = vmatpush.bf16.msra.mxu0 %v163
    %178 = vmatmul.bf16.gmra.mxu0 %v168
    %v179 = vpop.f32.mrf.mxu0
    %v180 = vadd.f32 %v153, %v179
    %v181 = vpop.f32.mrf.mxu0
    %182 = vdwg.mxu0
    %v183 = vld [vmem:[#allocation8] sm:$0xff]
    %v184 = vld [vmem:[#allocation10] sm:$0xff]
    %v185 = vmul.f32 %v180, %v183
    %187 = vrot.lane.b32.xlu0 %v184, 16
    %v188 = vpop.permute.xlu0 %187
    %v190 = vmul.f32 %v180, %v188
    %192 = vrot.lane.b32.xlu0 %v190, 112
    %v193 = vpop.permute.xlu0 %192
    %v195 = vsub.f32 %v185, %v193
    %v196 = vpack.c.bf16 %v195, %v195
    %vm197 = vcmask 125952
    %198 = vst.msk [vmem:[#allocation11] sm:$0xf] %vm197, %v196
    %200 = vrot.lane.b32.xlu0 %v183, 16
    %v201 = vpop.permute.xlu0 %200
    %v203 = vmul.f32 %v180, %v201
    %v204 = vmul.f32 %v180, %v184
    %206 = vrot.lane.b32.xlu0 %v204, 16
    %v207 = vpop.permute.xlu0 %206
    %v209 = vadd.f32 %v203, %v207
    %v210 = vpack.c.bf16 %v209, %v209
    %212 = vrot.lane.b32.xlu0 %v210, 112
    %v213 = vpop.permute.xlu0 %212
    %215 = vst.msk [vmem:[#allocation12] sm:$0xf] %vm197, %v213
    %216 = vrot.lane.b32.xlu0 %v183, 32
    %v217 = vpop.permute.xlu0 %216
    %v219 = vmul.f32 %v180, %v217
    %220 = vrot.lane.b32.xlu0 %v184, 48
    %v221 = vpop.permute.xlu0 %220
    %v223 = vmul.f32 %v180, %v221
    %225 = vrot.lane.b32.xlu0 %v223, 112
    %v226 = vpop.permute.xlu0 %225
    %v228 = vsub.f32 %v219, %v226
    %v229 = vpack.c.bf16 %v228, %v228
    %231 = vrot.lane.b32.xlu0 %v229, 96
    %v232 = vpop.permute.xlu0 %231
    %234 = vst.msk [vmem:[#allocation14] sm:$0xf] %vm197, %v232
    %235 = vrot.lane.b32.xlu0 %v183, 48
    %v236 = vpop.permute.xlu0 %235
    %v238 = vmul.f32 %v180, %v236
    %239 = vrot.lane.b32.xlu0 %v184, 32
    %v240 = vpop.permute.xlu0 %239
    %v242 = vmul.f32 %v180, %v240
    %244 = vrot.lane.b32.xlu0 %v242, 16
    %v245 = vpop.permute.xlu0 %244
    %v247 = vadd.f32 %v238, %v245
    %v248 = vpack.c.bf16 %v247, %v247
    %250 = vrot.lane.b32.xlu0 %v248, 80
    %v251 = vpop.permute.xlu0 %250
    %253 = vst.msk [vmem:[#allocation15] sm:$0xf] %vm197, %v251
    %v254 = vpack.c.bf16 %v180, %v180
    %256 = vrot.lane.b32.xlu0 %v254, 64
    %v257 = vpop.permute.xlu0 %256
    %vm259 = vcmask 257024
    %260 = vst.msk [vmem:[#allocation17] sm:$0xf] %vm259, %v257
    // Predicated region
    $region50: #{tpu_custom_call.1} parent=1 // pred_check
      _
    $region51: #{tpu_custom_call.1} parent=1 // pred_check_branch
      %262 = sbr.rel (0) target = $region53
    $region52: #{tpu_custom_call.1} parent=1 // pred_region
      %264 = vsyncadd [#allocation4], 0
      %s266 = sshll.u32 [#allocation11], 4
      %s267 = int_to_ptr.vmem [resolvable:$true] %s266
      %s268 = sshll.u32 %s7, 4
      %s269 = int_to_ptr.hbm [resolvable:$true] %s268
      %271 = dma.vmem_to_hbm [thread:$0]  %s267, 64, %s269, [#allocation4]
    $region53: #{tpu_custom_call.1} parent=1 // pred_fallthru
      _
    // Predicated region
    $region54: #{tpu_custom_call.1} parent=1 // pred_check
      _
    $region55: #{tpu_custom_call.1} parent=1 // pred_check_branch
      %273 = sbr.rel (0) target = $region57
    $region56: #{tpu_custom_call.1} parent=1 // pred_region
      %275 = vsyncadd [#allocation13], 0
      %s277 = sshll.u32 [#allocation12], 4
      %s278 = int_to_ptr.vmem [resolvable:$true] %s277
      %s279 = sshll.u32 %s8, 4
      %s280 = int_to_ptr.hbm [resolvable:$true] %s279
      %282 = dma.vmem_to_hbm [thread:$0]  %s278, 64, %s280, [#allocation13]
    $region57: #{tpu_custom_call.1} parent=1 // pred_fallthru
      _
    // Predicated region
    $region58: #{tpu_custom_call.1} parent=1 // pred_check
      _
    $region59: #{tpu_custom_call.1} parent=1 // pred_check_branch
      %284 = sbr.rel (0) target = $region61
    $region60: #{tpu_custom_call.1} parent=1 // pred_region
      %286 = vsyncadd [#allocation13], 0
      %s288 = sshll.u32 [#allocation14], 4
      %s289 = int_to_ptr.vmem [resolvable:$true] %s288
      %s290 = sshll.u32 %s9, 4
      %s291 = int_to_ptr.hbm [resolvable:$true] %s290
      %293 = dma.vmem_to_hbm [thread:$0]  %s289, 64, %s291, [#allocation13]
    $region61: #{tpu_custom_call.1} parent=1 // pred_fallthru
      _
    // Predicated region
    $region62: #{tpu_custom_call.1} parent=1 // pred_check
      _
    $region63: #{tpu_custom_call.1} parent=1 // pred_check_branch
      %295 = sbr.rel (0) target = $region65
    $region64: #{tpu_custom_call.1} parent=1 // pred_region
      %297 = vsyncadd [#allocation16], 0
      %s299 = sshll.u32 [#allocation15], 4
      %s300 = int_to_ptr.vmem [resolvable:$true] %s299
      %s301 = sshll.u32 %s10, 4
      %s302 = int_to_ptr.hbm [resolvable:$true] %s301
      %304 = dma.vmem_to_hbm [thread:$0]  %s300, 64, %s302, [#allocation16]
    $region65: #{tpu_custom_call.1} parent=1 // pred_fallthru
      _
    // Predicated region
    $region66: #{tpu_custom_call.1} parent=1 // pred_check
      _
    $region67: #{tpu_custom_call.1} parent=1 // pred_check_branch
      %306 = sbr.rel (0) target = $region69
    $region68: #{tpu_custom_call.1} parent=1 // pred_region
      %308 = vsyncadd [#allocation16], 0
      %s310 = sshll.u32 [#allocation17], 4
      %s311 = int_to_ptr.vmem [resolvable:$true] %s310
      %s312 = sshll.u32 %s11, 4
      %s313 = int_to_ptr.hbm [resolvable:$true] %s312
      %315 = dma.vmem_to_hbm [thread:$0]  %s311, 64, %s313, [#allocation16]
    $region69: #{tpu_custom_call.1} parent=1 // pred_fallthru
      _
    // Predicated region
    $region70: #{tpu_custom_call.1} parent=1 // pred_check
      _
    $region71: #{tpu_custom_call.1} parent=1 // pred_check_branch
      %317 = sbr.rel (0) target = $region73
    $region72: #{tpu_custom_call.1} parent=1 // pred_region
      %319 = dma.done [#allocation4], 64
    $region73: #{tpu_custom_call.1} parent=1 // pred_fallthru
      _
    // Predicated region
    $region74: #{tpu_custom_call.1} parent=1 // pred_check
      _
    $region75: #{tpu_custom_call.1} parent=1 // pred_check_branch
      %321 = sbr.rel (0) target = $region77
    $region76: #{tpu_custom_call.1} parent=1 // pred_region
      %323 = dma.done [#allocation13], 64
    $region77: #{tpu_custom_call.1} parent=1 // pred_fallthru
      _
    // Predicated region
    $region78: #{tpu_custom_call.1} parent=1 // pred_check
      _
    $region79: #{tpu_custom_call.1} parent=1 // pred_check_branch
      %325 = sbr.rel (0) target = $region81
    $region80: #{tpu_custom_call.1} parent=1 // pred_region
      %327 = dma.done [#allocation13], 64
    $region81: #{tpu_custom_call.1} parent=1 // pred_fallthru
      _
    // Predicated region
    $region82: #{tpu_custom_call.1} parent=1 // pred_check
      _
    $region83: #{tpu_custom_call.1} parent=1 // pred_check_branch
      %329 = sbr.rel (0) target = $region85
    $region84: #{tpu_custom_call.1} parent=1 // pred_region
      %331 = dma.done [#allocation16], 64
    $region85: #{tpu_custom_call.1} parent=1 // pred_fallthru
      _
    // Predicated region
    $region86: #{tpu_custom_call.1} parent=1 // pred_check
      _
    $region87: #{tpu_custom_call.1} parent=1 // pred_check_branch
      %333 = sbr.rel (0) target = $region89
    $region88: #{tpu_custom_call.1} parent=1 // pred_region
      %335 = dma.done [#allocation16], 64
    $region89: #{tpu_custom_call.1} parent=1 // pred_fallthru
      _
    %336 = vsyncpa [#allocation3], 1
    %337 = vsyncpa [#allocation6], 1
    %338 = vsyncpa [#allocation9], 1
    %339 = vsyncpa [#allocation4], 1
    %340 = vsyncpa [#allocation13], 1
    %341 = vsyncpa [#allocation16], 1

</llo_original>
